<compile_context>
chip_gen: v7x
topology: tpu7x:2x2x1
jax: 0.10.0
libtpu: 0.0.40
codegen_flags: <defaults>
</compile_context>

<pallas_src>
import jax
import jax.numpy as jnp
from jax.experimental import pallas as pl
from jax.experimental.pallas import tpu as pltpu


def _add_relu_conv1x1_kernel(a_ref, b_ref, w_ref, o_ref):
    # a_ref, b_ref: [Cin, P] bf16; w_ref: [Cout, Cin] bf16; o_ref: [Cout, P] f32
    x = jnp.maximum(a_ref[...] + b_ref[...], 0.0)          # add + ReLU (VPU, bf16)
    o_ref[...] = jnp.dot(                                   # 1x1 conv == matmul (MXU)
        w_ref[...], x, preferred_element_type=jnp.float32
    ).astype(o_ref.dtype)


def add_relu_conv1x1(x345, x359, conv_weight):
    """x345, x359: [N, C, H, W] float32; conv_weight: [Cout, Cin, 1, 1] (no bias).

    Returns conv2d(relu(x345 + x359)) in float32, shape [N, Cout, H, W].
    """
    N, C, H, W = x345.shape
    Cout = conv_weight.shape[0]
    P = H * W

    # Free reshapes only (no transposes).  bf16 cast halves HBM bytes for the
    # activations and the weight; the MXU already runs bf16 x bf16 -> f32.
    a = x345.reshape(N, C, P).astype(jnp.bfloat16)
    b = x359.reshape(N, C, P).astype(jnp.bfloat16)
    w = conv_weight.reshape(Cout, C).astype(jnp.bfloat16)

    cost = pl.CostEstimate(
        flops=2 * N * P * C * Cout,
        transcendentals=0,
        # bf16 inputs + weight, f32 output.
        bytes_accessed=(2 * N * C * P + Cout * C) * 2 + N * Cout * P * 4,
    )

    if N == 1:
        # Single grid point: no grid, whole-array VMEM refs -> no pipeline
        # stages / double buffering.  VMEM footprint < 1 MB on all chips.
        out2d = pl.pallas_call(
            _add_relu_conv1x1_kernel,
            out_shape=jax.ShapeDtypeStruct((Cout, P), jnp.float32),
            cost_estimate=cost,
        )(a.reshape(C, P), b.reshape(C, P), w)
        return out2d.reshape(N, Cout, H, W)

    # Batched path: grid over N only (weight stays resident across all steps;
    # no Cout split, so no redundant weight re-fetches per batch element).
    out_flat = pl.pallas_call(
        _add_relu_conv1x1_kernel,
        out_shape=jax.ShapeDtypeStruct((N, Cout, P), jnp.float32),
        grid=(N,),
        in_specs=[
            pl.BlockSpec((None, C, P), lambda n: (n, 0, 0)),   # a
            pl.BlockSpec((None, C, P), lambda n: (n, 0, 0)),   # b
            pl.BlockSpec((Cout, C), lambda n: (0, 0)),         # weight (constant)
        ],
        out_specs=pl.BlockSpec((None, Cout, P), lambda n: (n, 0, 0)),
        compiler_params=pltpu.CompilerParams(dimension_semantics=("parallel",)),
        cost_estimate=cost,
    )(a, b, w)
    return out_flat.reshape(N, Cout, H, W)


if __name__ == "__main__":
    key = jax.random.PRNGKey(0)
    k1, k2, k3 = jax.random.split(key, 3)

    # Shapes from the module spec: [1, 336, 14, 14], Conv2d(336, 336, 1x1, bias=False).
    N, C, H, W = 1, 336, 14, 14
    x345 = jax.random.normal(k1, (N, C, H, W), dtype=jnp.float32)
    x359 = jax.random.normal(k2, (N, C, H, W), dtype=jnp.float32)
    # Deterministic conv weight init (kaiming-uniform-ish scale, fixed seed).
    fan_in = C  # 1x1 kernel
    bound = 1.0 / (fan_in ** 0.5)
    conv_w = jax.random.uniform(
        k3, (C, C, 1, 1), dtype=jnp.float32, minval=-bound, maxval=bound
    )

    out = add_relu_conv1x1(x345, x359, conv_w)
    jax.block_until_ready(out)

    # Sanity check against pure-JAX (f32) reference.
    ref = jnp.einsum(
        "nchw,oc->nohw",
        jnp.maximum(x345 + x359, 0.0),
        conv_w.reshape(C, C),
    )
    assert out.shape == (N, C, H, W)
    # bf16 activations + bf16 MXU operands (f32 accumulation) -> loose tolerance.
    assert jnp.allclose(out, ref, atol=5e-2, rtol=5e-2), float(
        jnp.max(jnp.abs(out - ref))
    )

    print("KERNEL_OK")
</pallas_src>

<mosaic_0001>
module attributes {stable_mosaic.version = 11 : i64} {
  func.func @_add_relu_conv1x1_kernel(%arg0: memref<336x196xbf16, #tpu.memory_space<vmem>>, %arg1: memref<336x196xbf16, #tpu.memory_space<vmem>>, %arg2: memref<336x336xbf16, #tpu.memory_space<vmem>>, %arg3: memref<336x196xf32, #tpu.memory_space<vmem>>) attributes {dimension_semantics = [], scalar_prefetch = 0 : i64, scratch_operands = 0 : i64, tpu.core_type = #tpu.core_type<tc>} {
    %c0 = arith.constant 0 : index
    %c0_0 = arith.constant 0 : index
    %0 = vector.load %arg0[%c0, %c0_0] : memref<336x196xbf16, #tpu.memory_space<vmem>>, vector<336x196xbf16>
    %c0_1 = arith.constant 0 : index
    %c0_2 = arith.constant 0 : index
    %1 = vector.load %arg1[%c0_1, %c0_2] : memref<336x196xbf16, #tpu.memory_space<vmem>>, vector<336x196xbf16>
    %2 = arith.addf %0, %1 : vector<336x196xbf16>
    %cst = arith.constant 0.000000e+00 : bf16
    %3 = vector.broadcast %cst : bf16 to vector<336x196xbf16>
    %4 = arith.maximumf %2, %3 : vector<336x196xbf16>
    %c0_3 = arith.constant 0 : index
    %c0_4 = arith.constant 0 : index
    %5 = vector.load %arg2[%c0_3, %c0_4] : memref<336x336xbf16, #tpu.memory_space<vmem>>, vector<336x336xbf16>
    %cst_5 = arith.constant dense<0.000000e+00> : vector<336x196xf32>
    %6 = tpu.matmul %5, %4, %cst_5 {dimension_numbers = #tpu.dot_dimension_numbers<[1], [0], [0], [1], [0, 0, 1, 1], [], []>} : vector<336x336xbf16>, vector<336x196xbf16>, vector<336x196xf32> -> vector<336x196xf32>
    %c0_6 = arith.constant 0 : index
    %c0_7 = arith.constant 0 : index
    %7 = vector.load %arg3[%c0_6, %c0_7] : memref<336x196xf32, #tpu.memory_space<vmem>>, vector<336x196xf32>
    tpu.vector_store %arg3[%c0_6, %c0_7], %6 {strides = array<i32>} : memref<336x196xf32, #tpu.memory_space<vmem>>, vector<336x196xf32>,
    return
  }
}

</mosaic_0001>

<llo_original>
// kernel: tpu_custom_call.1
$region0: #{tpu_custom_call.1}
  #allocation0 [shape = 'u32[]', space=smem, size = 0x4, offset = 0x4, fixed_abs, tag = 'smem constant byte address 0x4 - core index']
  #allocation1 [shape = 'u32[144,128]{1,0:T(1,128)}', space=vmem, size = 0x12000, scoped, tag = 'internal scratch']
  %s0 = inlined_call_operand.vmem [shape: bf16[336,196], index: 0, kind: input, shape index: {}]
  %s1 = inlined_call_operand.vmem [shape: bf16[336,196], index: 1, kind: input, shape index: {}]
  %s2 = inlined_call_operand.vmem [shape: bf16[336,336], index: 2, kind: input, shape index: {}]
  %s3 = inlined_call_operand.vmem [shape: f32[336,196], index: 3, kind: output, shape index: {}]
  %s4 = sld [smem:[#allocation0]]
  $region22: #{tpu_custom_call.1} parent=0
    _
  %s6 = ssub.s32 1, %s4
  %s7 = scalar_select 0, %s6, %s4
  // Predicated region
  $region2: #{tpu_custom_call.1} parent=0 // pred_check
    _
  $region3: #{tpu_custom_call.1} parent=0 // pred_check_branch
    %9 = sbr.rel (0) target = $region5
  $region4: #{tpu_custom_call.1} parent=0 // pred_region
    _
  $region5: #{tpu_custom_call.1} parent=0 // pred_fallthru
    _
  // Predicated region
  $region6: #{tpu_custom_call.1} parent=0 // pred_check
    _
  $region7: #{tpu_custom_call.1} parent=0 // pred_check_branch
    %11 = sbr.rel (0) target = $region9
  $region8: #{tpu_custom_call.1} parent=0 // pred_region
    _
  $region9: #{tpu_custom_call.1} parent=0 // pred_fallthru
    _
  // Predicated region
  $region10: #{tpu_custom_call.1} parent=0 // pred_check
    _
  $region11: #{tpu_custom_call.1} parent=0 // pred_check_branch
    %13 = sbr.rel (0) target = $region13
  $region12: #{tpu_custom_call.1} parent=0 // pred_region
    _
  $region13: #{tpu_custom_call.1} parent=0 // pred_fallthru
    _
  %v15 = vld [vmem:[%s0] sm:$0xff]
  %v16 = vld [vmem:[%s0 + $0x8] sm:$0xff]
  %v17 = vld [vmem:[%s0 + $0x10] sm:$0xff]
  %v18 = vld [vmem:[%s0 + $0x18] sm:$0xff]
  %v19 = vld [vmem:[%s0 + $0x20] sm:$0xff]
  %v20 = vld [vmem:[%s0 + $0x28] sm:$0xff]
  %v21 = vld [vmem:[%s0 + $0x30] sm:$0xff]
  %v22 = vld [vmem:[%s0 + $0x38] sm:$0xff]
  %v23 = vld [vmem:[%s0 + $0x40] sm:$0xff]
  %v24 = vld [vmem:[%s0 + $0x48] sm:$0xff]
  %v25 = vld [vmem:[%s0 + $0x50] sm:$0xff]
  %v26 = vld [vmem:[%s0 + $0x58] sm:$0xff]
  %v27 = vld [vmem:[%s0 + $0x60] sm:$0xff]
  %v28 = vld [vmem:[%s0 + $0x68] sm:$0xff]
  %v29 = vld [vmem:[%s0 + $0x70] sm:$0xff]
  %v30 = vld [vmem:[%s0 + $0x78] sm:$0xff]
  %v31 = vld [vmem:[%s0 + $0x80] sm:$0xff]
  %v32 = vld [vmem:[%s0 + $0x88] sm:$0xff]
  %v33 = vld [vmem:[%s0 + $0x90] sm:$0xff]
  %v34 = vld [vmem:[%s0 + $0x98] sm:$0xff]
  %v35 = vld [vmem:[%s0 + $0xa0] sm:$0xff]
  %v36 = vld [vmem:[%s0 + $0xa8] sm:$0xff]
  %v37 = vld [vmem:[%s0 + $0xb0] sm:$0xff]
  %v38 = vld [vmem:[%s0 + $0xb8] sm:$0xff]
  %v39 = vld [vmem:[%s0 + $0xc0] sm:$0xff]
  %v40 = vld [vmem:[%s0 + $0xc8] sm:$0xff]
  %v41 = vld [vmem:[%s0 + $0xd0] sm:$0xff]
  %v42 = vld [vmem:[%s0 + $0xd8] sm:$0xff]
  %v43 = vld [vmem:[%s0 + $0xe0] sm:$0xff]
  %v44 = vld [vmem:[%s0 + $0xe8] sm:$0xff]
  %v45 = vld [vmem:[%s0 + $0xf0] sm:$0xff]
  %v46 = vld [vmem:[%s0 + $0xf8] sm:$0xff]
  %v47 = vld [vmem:[%s0 + $0x100] sm:$0xff]
  %v48 = vld [vmem:[%s0 + $0x108] sm:$0xff]
  %v49 = vld [vmem:[%s0 + $0x110] sm:$0xff]
  %v50 = vld [vmem:[%s0 + $0x118] sm:$0xff]
  %v51 = vld [vmem:[%s0 + $0x120] sm:$0xff]
  %v52 = vld [vmem:[%s0 + $0x128] sm:$0xff]
  %v53 = vld [vmem:[%s0 + $0x130] sm:$0xff]
  %v54 = vld [vmem:[%s0 + $0x138] sm:$0xff]
  %v55 = vld [vmem:[%s0 + $0x140] sm:$0xff]
  %v56 = vld [vmem:[%s0 + $0x148] sm:$0xff]
  %v57 = vld [vmem:[%s1] sm:$0xff]
  %v58 = vld [vmem:[%s1 + $0x8] sm:$0xff]
  %v59 = vld [vmem:[%s1 + $0x10] sm:$0xff]
  %v60 = vld [vmem:[%s1 + $0x18] sm:$0xff]
  %v61 = vld [vmem:[%s1 + $0x20] sm:$0xff]
  %v62 = vld [vmem:[%s1 + $0x28] sm:$0xff]
  %v63 = vld [vmem:[%s1 + $0x30] sm:$0xff]
  %v64 = vld [vmem:[%s1 + $0x38] sm:$0xff]
  %v65 = vld [vmem:[%s1 + $0x40] sm:$0xff]
  %v66 = vld [vmem:[%s1 + $0x48] sm:$0xff]
  %v67 = vld [vmem:[%s1 + $0x50] sm:$0xff]
  %v68 = vld [vmem:[%s1 + $0x58] sm:$0xff]
  %v69 = vld [vmem:[%s1 + $0x60] sm:$0xff]
  %v70 = vld [vmem:[%s1 + $0x68] sm:$0xff]
  %v71 = vld [vmem:[%s1 + $0x70] sm:$0xff]
  %v72 = vld [vmem:[%s1 + $0x78] sm:$0xff]
  %v73 = vld [vmem:[%s1 + $0x80] sm:$0xff]
  %v74 = vld [vmem:[%s1 + $0x88] sm:$0xff]
  %v75 = vld [vmem:[%s1 + $0x90] sm:$0xff]
  %v76 = vld [vmem:[%s1 + $0x98] sm:$0xff]
  %v77 = vld [vmem:[%s1 + $0xa0] sm:$0xff]
  %v78 = vld [vmem:[%s1 + $0xa8] sm:$0xff]
  %v79 = vld [vmem:[%s1 + $0xb0] sm:$0xff]
  %v80 = vld [vmem:[%s1 + $0xb8] sm:$0xff]
  %v81 = vld [vmem:[%s1 + $0xc0] sm:$0xff]
  %v82 = vld [vmem:[%s1 + $0xc8] sm:$0xff]
  %v83 = vld [vmem:[%s1 + $0xd0] sm:$0xff]
  %v84 = vld [vmem:[%s1 + $0xd8] sm:$0xff]
  %v85 = vld [vmem:[%s1 + $0xe0] sm:$0xff]
  %v86 = vld [vmem:[%s1 + $0xe8] sm:$0xff]
  %v87 = vld [vmem:[%s1 + $0xf0] sm:$0xff]
  %v88 = vld [vmem:[%s1 + $0xf8] sm:$0xff]
  %v89 = vld [vmem:[%s1 + $0x100] sm:$0xff]
  %v90 = vld [vmem:[%s1 + $0x108] sm:$0xff]
  %v91 = vld [vmem:[%s1 + $0x110] sm:$0xff]
  %v92 = vld [vmem:[%s1 + $0x118] sm:$0xff]
  %v93 = vld [vmem:[%s1 + $0x120] sm:$0xff]
  %v94 = vld [vmem:[%s1 + $0x128] sm:$0xff]
  %v95 = vld [vmem:[%s1 + $0x130] sm:$0xff]
  %v96 = vld [vmem:[%s1 + $0x138] sm:$0xff]
  %v97 = vld [vmem:[%s1 + $0x140] sm:$0xff]
  %v98 = vld [vmem:[%s1 + $0x148] sm:$0xff]
  %v99 = vadd.bf16 %v15, %v57
  %v100 = vadd.bf16 %v16, %v58
  %v101 = vadd.bf16 %v17, %v59
  %v102 = vadd.bf16 %v18, %v60
  %v103 = vadd.bf16 %v19, %v61
  %v104 = vadd.bf16 %v20, %v62
  %v105 = vadd.bf16 %v21, %v63
  %v106 = vadd.bf16 %v22, %v64
  %v107 = vadd.bf16 %v23, %v65
  %v108 = vadd.bf16 %v24, %v66
  %v109 = vadd.bf16 %v25, %v67
  %v110 = vadd.bf16 %v26, %v68
  %v111 = vadd.bf16 %v27, %v69
  %v112 = vadd.bf16 %v28, %v70
  %v113 = vadd.bf16 %v29, %v71
  %v114 = vadd.bf16 %v30, %v72
  %v115 = vadd.bf16 %v31, %v73
  %v116 = vadd.bf16 %v32, %v74
  %v117 = vadd.bf16 %v33, %v75
  %v118 = vadd.bf16 %v34, %v76
  %v119 = vadd.bf16 %v35, %v77
  %v120 = vadd.bf16 %v36, %v78
  %v121 = vadd.bf16 %v37, %v79
  %v122 = vadd.bf16 %v38, %v80
  %v123 = vadd.bf16 %v39, %v81
  %v124 = vadd.bf16 %v40, %v82
  %v125 = vadd.bf16 %v41, %v83
  %v126 = vadd.bf16 %v42, %v84
  %v127 = vadd.bf16 %v43, %v85
  %v128 = vadd.bf16 %v44, %v86
  %v129 = vadd.bf16 %v45, %v87
  %v130 = vadd.bf16 %v46, %v88
  %v131 = vadd.bf16 %v47, %v89
  %v132 = vadd.bf16 %v48, %v90
  %v133 = vadd.bf16 %v49, %v91
  %v134 = vadd.bf16 %v50, %v92
  %v135 = vadd.bf16 %v51, %v93
  %v136 = vadd.bf16 %v52, %v94
  %v137 = vadd.bf16 %v53, %v95
  %v138 = vadd.bf16 %v54, %v96
  %v139 = vadd.bf16 %v55, %v97
  %v140 = vadd.bf16 %v56, %v98
  %v141 = vmax.bf16 %v99, 0
  %v142 = vmax.bf16 %v100, 0
  %v143 = vmax.bf16 %v101, 0
  %v144 = vmax.bf16 %v102, 0
  %v145 = vmax.bf16 %v103, 0
  %v146 = vmax.bf16 %v104, 0
  %v147 = vmax.bf16 %v105, 0
  %v148 = vmax.bf16 %v106, 0
  %v149 = vmax.bf16 %v107, 0
  %v150 = vmax.bf16 %v108, 0
  %v151 = vmax.bf16 %v109, 0
  %v152 = vmax.bf16 %v110, 0
  %v153 = vmax.bf16 %v111, 0
  %v154 = vmax.bf16 %v112, 0
  %v155 = vmax.bf16 %v113, 0
  %v156 = vmax.bf16 %v114, 0
  %v157 = vmax.bf16 %v115, 0
  %v158 = vmax.bf16 %v116, 0
  %v159 = vmax.bf16 %v117, 0
  %v160 = vmax.bf16 %v118, 0
  %v161 = vmax.bf16 %v119, 0
  %v162 = vmax.bf16 %v120, 0
  %v163 = vmax.bf16 %v121, 0
  %v164 = vmax.bf16 %v122, 0
  %v165 = vmax.bf16 %v123, 0
  %v166 = vmax.bf16 %v124, 0
  %v167 = vmax.bf16 %v125, 0
  %v168 = vmax.bf16 %v126, 0
  %v169 = vmax.bf16 %v127, 0
  %v170 = vmax.bf16 %v128, 0
  %v171 = vmax.bf16 %v129, 0
  %v172 = vmax.bf16 %v130, 0
  %v173 = vmax.bf16 %v131, 0
  %v174 = vmax.bf16 %v132, 0
  %v175 = vmax.bf16 %v133, 0
  %v176 = vmax.bf16 %v134, 0
  %v177 = vmax.bf16 %v135, 0
  %v178 = vmax.bf16 %v136, 0
  %v179 = vmax.bf16 %v137, 0
  %v180 = vmax.bf16 %v138, 0
  %v181 = vmax.bf16 %v139, 0
  %v182 = vmax.bf16 %v140, 0
  %v183 = vld [vmem:[%s2] sm:$0xff]
  %v184 = vld [vmem:[%s2 + $0x8] sm:$0xf]
  %v185 = vld [vmem:[%s2 + $0xc] sm:$0xff]
  %v186 = vld [vmem:[%s2 + $0x14] sm:$0xf]
  %v187 = vld [vmem:[%s2 + $0x18] sm:$0xff]
  %v188 = vld [vmem:[%s2 + $0x20] sm:$0xf]
  %v189 = vld [vmem:[%s2 + $0x24] sm:$0xff]
  %v190 = vld [vmem:[%s2 + $0x2c] sm:$0xf]
  %v191 = vld [vmem:[%s2 + $0x30] sm:$0xff]
  %v192 = vld [vmem:[%s2 + $0x38] sm:$0xf]
  %v193 = vld [vmem:[%s2 + $0x3c] sm:$0xff]
  %v194 = vld [vmem:[%s2 + $0x44] sm:$0xf]
  %v195 = vld [vmem:[%s2 + $0x48] sm:$0xff]
  %v196 = vld [vmem:[%s2 + $0x50] sm:$0xf]
  %v197 = vld [vmem:[%s2 + $0x54] sm:$0xff]
  %v198 = vld [vmem:[%s2 + $0x5c] sm:$0xf]
  %v199 = vld [vmem:[%s2 + $0x60] sm:$0xff]
  %v200 = vld [vmem:[%s2 + $0x68] sm:$0xf]
  %v201 = vld [vmem:[%s2 + $0x6c] sm:$0xff]
  %v202 = vld [vmem:[%s2 + $0x74] sm:$0xf]
  %v203 = vld [vmem:[%s2 + $0x78] sm:$0xff]
  %v204 = vld [vmem:[%s2 + $0x80] sm:$0xf]
  %v205 = vld [vmem:[%s2 + $0x84] sm:$0xff]
  %v206 = vld [vmem:[%s2 + $0x8c] sm:$0xf]
  %v207 = vld [vmem:[%s2 + $0x90] sm:$0xff]
  %v208 = vld [vmem:[%s2 + $0x98] sm:$0xf]
  %v209 = vld [vmem:[%s2 + $0x9c] sm:$0xff]
  %v210 = vld [vmem:[%s2 + $0xa4] sm:$0xf]
  %v211 = vld [vmem:[%s2 + $0xa8] sm:$0xff]
  %v212 = vld [vmem:[%s2 + $0xb0] sm:$0xf]
  %v213 = vld [vmem:[%s2 + $0xb4] sm:$0xff]
  %v214 = vld [vmem:[%s2 + $0xbc] sm:$0xf]
  %v215 = vld [vmem:[%s2 + $0xc0] sm:$0xff]
  %v216 = vld [vmem:[%s2 + $0xc8] sm:$0xf]
  %v217 = vld [vmem:[%s2 + $0xcc] sm:$0xff]
  %v218 = vld [vmem:[%s2 + $0xd4] sm:$0xf]
  %v219 = vld [vmem:[%s2 + $0xd8] sm:$0xff]
  %v220 = vld [vmem:[%s2 + $0xe0] sm:$0xf]
  %v221 = vld [vmem:[%s2 + $0xe4] sm:$0xff]
  %v222 = vld [vmem:[%s2 + $0xec] sm:$0xf]
  %v223 = vld [vmem:[%s2 + $0xf0] sm:$0xff]
  %v224 = vld [vmem:[%s2 + $0xf8] sm:$0xf]
  %v225 = vld [vmem:[%s2 + $0xfc] sm:$0xff]
  %v226 = vld [vmem:[%s2 + $0x104] sm:$0xf]
  %v227 = vld [vmem:[%s2 + $0x108] sm:$0xff]
  %v228 = vld [vmem:[%s2 + $0x110] sm:$0xf]
  %v229 = vld [vmem:[%s2 + $0x114] sm:$0xff]
  %v230 = vld [vmem:[%s2 + $0x11c] sm:$0xf]
  %v231 = vld [vmem:[%s2 + $0x120] sm:$0xff]
  %v232 = vld [vmem:[%s2 + $0x128] sm:$0xf]
  %v233 = vld [vmem:[%s2 + $0x12c] sm:$0xff]
  %v234 = vld [vmem:[%s2 + $0x134] sm:$0xf]
  %v235 = vld [vmem:[%s2 + $0x138] sm:$0xff]
  %v236 = vld [vmem:[%s2 + $0x140] sm:$0xf]
  %v237 = vld [vmem:[%s2 + $0x144] sm:$0xff]
  %v238 = vld [vmem:[%s2 + $0x14c] sm:$0xf]
  %v239 = vld [vmem:[%s2 + $0x150] sm:$0xff]
  %v240 = vld [vmem:[%s2 + $0x158] sm:$0xf]
  %v241 = vld [vmem:[%s2 + $0x15c] sm:$0xff]
  %v242 = vld [vmem:[%s2 + $0x164] sm:$0xf]
  %v243 = vld [vmem:[%s2 + $0x168] sm:$0xff]
  %v244 = vld [vmem:[%s2 + $0x170] sm:$0xf]
  %v245 = vld [vmem:[%s2 + $0x174] sm:$0xff]
  %v246 = vld [vmem:[%s2 + $0x17c] sm:$0xf]
  %v247 = vld [vmem:[%s2 + $0x180] sm:$0xff]
  %v248 = vld [vmem:[%s2 + $0x188] sm:$0xf]
  %v249 = vld [vmem:[%s2 + $0x18c] sm:$0xff]
  %v250 = vld [vmem:[%s2 + $0x194] sm:$0xf]
  %v251 = vld [vmem:[%s2 + $0x198] sm:$0xff]
  %v252 = vld [vmem:[%s2 + $0x1a0] sm:$0xf]
  %v253 = vld [vmem:[%s2 + $0x1a4] sm:$0xff]
  %v254 = vld [vmem:[%s2 + $0x1ac] sm:$0xf]
  %v255 = vld [vmem:[%s2 + $0x1b0] sm:$0xff]
  %v256 = vld [vmem:[%s2 + $0x1b8] sm:$0xf]
  %v257 = vld [vmem:[%s2 + $0x1bc] sm:$0xff]
  %v258 = vld [vmem:[%s2 + $0x1c4] sm:$0xf]
  %v259 = vld [vmem:[%s2 + $0x1c8] sm:$0xff]
  %v260 = vld [vmem:[%s2 + $0x1d0] sm:$0xf]
  %v261 = vld [vmem:[%s2 + $0x1d4] sm:$0xff]
  %v262 = vld [vmem:[%s2 + $0x1dc] sm:$0xf]
  %v263 = vld [vmem:[%s2 + $0x1e0] sm:$0xff]
  %v264 = vld [vmem:[%s2 + $0x1e8] sm:$0xf]
  %v265 = vld [vmem:[%s2 + $0x1ec] sm:$0xff]
  %v266 = vld [vmem:[%s2 + $0x1f4] sm:$0xf]
  %v351 = vunpack.c.l.b16 %v183
  %v352 = vunpack.c.h.b16 %v183
  %v353 = vunpack.c.l.b16 %v184
  %v354 = vunpack.c.l.b16 %v185
  %v355 = vunpack.c.h.b16 %v185
  %v356 = vunpack.c.l.b16 %v186
  %v357 = vunpack.c.l.b16 %v187
  %v358 = vunpack.c.h.b16 %v187
  %v359 = vunpack.c.l.b16 %v188
  %v360 = vunpack.c.l.b16 %v189
  %v361 = vunpack.c.h.b16 %v189
  %v362 = vunpack.c.l.b16 %v190
  %v363 = vunpack.c.l.b16 %v191
  %v364 = vunpack.c.h.b16 %v191
  %v365 = vunpack.c.l.b16 %v192
  %v366 = vunpack.c.l.b16 %v193
  %v367 = vunpack.c.h.b16 %v193
  %v368 = vunpack.c.l.b16 %v194
  %v369 = vunpack.c.l.b16 %v195
  %v370 = vunpack.c.h.b16 %v195
  %v371 = vunpack.c.l.b16 %v196
  %v372 = vunpack.c.l.b16 %v197
  %v373 = vunpack.c.h.b16 %v197
  %v374 = vunpack.c.l.b16 %v198
  %v375 = vunpack.c.l.b16 %v199
  %v376 = vunpack.c.h.b16 %v199
  %v377 = vunpack.c.l.b16 %v200
  %v378 = vunpack.c.l.b16 %v201
  %v379 = vunpack.c.h.b16 %v201
  %v380 = vunpack.c.l.b16 %v202
  %v381 = vunpack.c.l.b16 %v203
  %v382 = vunpack.c.h.b16 %v203
  %v383 = vunpack.c.l.b16 %v204
  %v384 = vunpack.c.l.b16 %v205
  %v385 = vunpack.c.h.b16 %v205
  %v386 = vunpack.c.l.b16 %v206
  %v387 = vunpack.c.l.b16 %v207
  %v388 = vunpack.c.h.b16 %v207
  %v389 = vunpack.c.l.b16 %v208
  %v390 = vunpack.c.l.b16 %v209
  %v391 = vunpack.c.h.b16 %v209
  %v392 = vunpack.c.l.b16 %v210
  %v393 = vunpack.c.l.b16 %v211
  %v394 = vunpack.c.h.b16 %v211
  %v395 = vunpack.c.l.b16 %v212
  %v396 = vunpack.c.l.b16 %v213
  %v397 = vunpack.c.h.b16 %v213
  %v398 = vunpack.c.l.b16 %v214
  %v399 = vunpack.c.l.b16 %v215
  %v400 = vunpack.c.h.b16 %v215
  %v401 = vunpack.c.l.b16 %v216
  %v402 = vunpack.c.l.b16 %v217
  %v403 = vunpack.c.h.b16 %v217
  %v404 = vunpack.c.l.b16 %v218
  %v405 = vunpack.c.l.b16 %v219
  %v406 = vunpack.c.h.b16 %v219
  %v407 = vunpack.c.l.b16 %v220
  %v408 = vunpack.c.l.b16 %v221
  %v409 = vunpack.c.h.b16 %v221
  %v410 = vunpack.c.l.b16 %v222
  %v411 = vunpack.c.l.b16 %v223
  %v412 = vunpack.c.h.b16 %v223
  %v413 = vunpack.c.l.b16 %v224
  %v414 = vunpack.c.l.b16 %v225
  %v415 = vunpack.c.h.b16 %v225
  %v416 = vunpack.c.l.b16 %v226
  %v417 = vunpack.c.l.b16 %v227
  %v418 = vunpack.c.h.b16 %v227
  %v419 = vunpack.c.l.b16 %v228
  %v420 = vunpack.c.l.b16 %v229
  %v421 = vunpack.c.h.b16 %v229
  %v422 = vunpack.c.l.b16 %v230
  %v423 = vunpack.c.l.b16 %v231
  %v424 = vunpack.c.h.b16 %v231
  %v425 = vunpack.c.l.b16 %v232
  %v426 = vunpack.c.l.b16 %v233
  %v427 = vunpack.c.h.b16 %v233
  %v428 = vunpack.c.l.b16 %v234
  %v429 = vunpack.c.l.b16 %v235
  %v430 = vunpack.c.h.b16 %v235
  %v431 = vunpack.c.l.b16 %v236
  %v432 = vunpack.c.l.b16 %v237
  %v433 = vunpack.c.h.b16 %v237
  %v434 = vunpack.c.l.b16 %v238
  %v435 = vunpack.c.l.b16 %v239
  %v436 = vunpack.c.h.b16 %v239
  %v437 = vunpack.c.l.b16 %v240
  %v438 = vunpack.c.l.b16 %v241
  %v439 = vunpack.c.h.b16 %v241
  %v440 = vunpack.c.l.b16 %v242
  %v441 = vunpack.c.l.b16 %v243
  %v442 = vunpack.c.h.b16 %v243
  %v443 = vunpack.c.l.b16 %v244
  %v444 = vunpack.c.l.b16 %v245
  %v445 = vunpack.c.h.b16 %v245
  %v446 = vunpack.c.l.b16 %v246
  %v447 = vunpack.c.l.b16 %v247
  %v448 = vunpack.c.h.b16 %v247
  %v449 = vunpack.c.l.b16 %v248
  %v450 = vunpack.c.l.b16 %v249
  %v451 = vunpack.c.h.b16 %v249
  %v452 = vunpack.c.l.b16 %v250
  %v453 = vunpack.c.l.b16 %v251
  %v454 = vunpack.c.h.b16 %v251
  %v455 = vunpack.c.l.b16 %v252
  %v456 = vunpack.c.l.b16 %v253
  %v457 = vunpack.c.h.b16 %v253
  %v458 = vunpack.c.l.b16 %v254
  %v459 = vunpack.c.l.b16 %v255
  %v460 = vunpack.c.h.b16 %v255
  %v461 = vunpack.c.l.b16 %v256
  %v462 = vunpack.c.l.b16 %v257
  %v463 = vunpack.c.h.b16 %v257
  %v464 = vunpack.c.l.b16 %v258
  %v465 = vunpack.c.l.b16 %v259
  %v466 = vunpack.c.h.b16 %v259
  %v467 = vunpack.c.l.b16 %v260
  %v468 = vunpack.c.l.b16 %v261
  %v469 = vunpack.c.h.b16 %v261
  %v470 = vunpack.c.l.b16 %v262
  %v471 = vunpack.c.l.b16 %v263
  %v472 = vunpack.c.h.b16 %v263
  %v473 = vunpack.c.l.b16 %v264
  %v474 = vunpack.c.l.b16 %v265
  %v475 = vunpack.c.h.b16 %v265
  %v476 = vunpack.c.l.b16 %v266
  %v477 = vpack.c.b16 %v354, %v351
  %v478 = vpack.c.b16 %v355, %v352
  %v479 = vpack.c.b16 %v356, %v353
  %v480 = vpack.c.b16 %v360, %v357
  %v481 = vpack.c.b16 %v361, %v358
  %v482 = vpack.c.b16 %v362, %v359
  %v483 = vpack.c.b16 %v366, %v363
  %v484 = vpack.c.b16 %v367, %v364
  %v485 = vpack.c.b16 %v368, %v365
  %v486 = vpack.c.b16 %v372, %v369
  %v487 = vpack.c.b16 %v373, %v370
  %v488 = vpack.c.b16 %v374, %v371
  %v489 = vpack.c.b16 %v378, %v375
  %v490 = vpack.c.b16 %v379, %v376
  %v491 = vpack.c.b16 %v380, %v377
  %v492 = vpack.c.b16 %v384, %v381
  %v493 = vpack.c.b16 %v385, %v382
  %v494 = vpack.c.b16 %v386, %v383
  %v495 = vpack.c.b16 %v390, %v387
  %v496 = vpack.c.b16 %v391, %v388
  %v497 = vpack.c.b16 %v392, %v389
  %v498 = vpack.c.b16 %v396, %v393
  %v499 = vpack.c.b16 %v397, %v394
  %v500 = vpack.c.b16 %v398, %v395
  %v501 = vpack.c.b16 %v402, %v399
  %v502 = vpack.c.b16 %v403, %v400
  %v503 = vpack.c.b16 %v404, %v401
  %v504 = vpack.c.b16 %v408, %v405
  %v505 = vpack.c.b16 %v409, %v406
  %v506 = vpack.c.b16 %v410, %v407
  %v507 = vpack.c.b16 %v414, %v411
  %v508 = vpack.c.b16 %v415, %v412
  %v509 = vpack.c.b16 %v416, %v413
  %v510 = vpack.c.b16 %v420, %v417
  %v511 = vpack.c.b16 %v421, %v418
  %v512 = vpack.c.b16 %v422, %v419
  %v513 = vpack.c.b16 %v426, %v423
  %v514 = vpack.c.b16 %v427, %v424
  %v515 = vpack.c.b16 %v428, %v425
  %v516 = vpack.c.b16 %v432, %v429
  %v517 = vpack.c.b16 %v433, %v430
  %v518 = vpack.c.b16 %v434, %v431
  %v519 = vpack.c.b16 %v438, %v435
  %v520 = vpack.c.b16 %v439, %v436
  %v521 = vpack.c.b16 %v440, %v437
  %v522 = vpack.c.b16 %v444, %v441
  %v523 = vpack.c.b16 %v445, %v442
  %v524 = vpack.c.b16 %v446, %v443
  %v525 = vpack.c.b16 %v450, %v447
  %v526 = vpack.c.b16 %v451, %v448
  %v527 = vpack.c.b16 %v452, %v449
  %v528 = vpack.c.b16 %v456, %v453
  %v529 = vpack.c.b16 %v457, %v454
  %v530 = vpack.c.b16 %v458, %v455
  %v531 = vpack.c.b16 %v462, %v459
  %v532 = vpack.c.b16 %v463, %v460
  %v533 = vpack.c.b16 %v464, %v461
  %v534 = vpack.c.b16 %v468, %v465
  %v535 = vpack.c.b16 %v469, %v466
  %v536 = vpack.c.b16 %v470, %v467
  %v537 = vpack.c.b16 %v474, %v471
  %v538 = vpack.c.b16 %v475, %v472
  %v539 = vpack.c.b16 %v476, %v473
  %v624 = vunpack.c.l.b16 %v141
  %v625 = vunpack.c.h.b16 %v141
  %v626 = vunpack.c.l.b16 %v142
  %v627 = vunpack.c.h.b16 %v142
  %v628 = vunpack.c.l.b16 %v143
  %v629 = vunpack.c.h.b16 %v143
  %v630 = vunpack.c.l.b16 %v144
  %v631 = vunpack.c.h.b16 %v144
  %v632 = vunpack.c.l.b16 %v145
  %v633 = vunpack.c.h.b16 %v145
  %v634 = vunpack.c.l.b16 %v146
  %v635 = vunpack.c.h.b16 %v146
  %v636 = vunpack.c.l.b16 %v147
  %v637 = vunpack.c.h.b16 %v147
  %v638 = vunpack.c.l.b16 %v148
  %v639 = vunpack.c.h.b16 %v148
  %v640 = vunpack.c.l.b16 %v149
  %v641 = vunpack.c.h.b16 %v149
  %v642 = vunpack.c.l.b16 %v150
  %v643 = vunpack.c.h.b16 %v150
  %v644 = vunpack.c.l.b16 %v151
  %v645 = vunpack.c.h.b16 %v151
  %v646 = vunpack.c.l.b16 %v152
  %v647 = vunpack.c.h.b16 %v152
  %v648 = vunpack.c.l.b16 %v153
  %v649 = vunpack.c.h.b16 %v153
  %v650 = vunpack.c.l.b16 %v154
  %v651 = vunpack.c.h.b16 %v154
  %v652 = vunpack.c.l.b16 %v155
  %v653 = vunpack.c.h.b16 %v155
  %v654 = vunpack.c.l.b16 %v156
  %v655 = vunpack.c.h.b16 %v156
  %v656 = vunpack.c.l.b16 %v157
  %v657 = vunpack.c.h.b16 %v157
  %v658 = vunpack.c.l.b16 %v158
  %v659 = vunpack.c.h.b16 %v158
  %v660 = vunpack.c.l.b16 %v159
  %v661 = vunpack.c.h.b16 %v159
  %v662 = vunpack.c.l.b16 %v160
  %v663 = vunpack.c.h.b16 %v160
  %v664 = vunpack.c.l.b16 %v161
  %v665 = vunpack.c.h.b16 %v161
  %v666 = vunpack.c.l.b16 %v162
  %v667 = vunpack.c.h.b16 %v162
  %v668 = vunpack.c.l.b16 %v163
  %v669 = vunpack.c.h.b16 %v163
  %v670 = vunpack.c.l.b16 %v164
  %v671 = vunpack.c.h.b16 %v164
  %v672 = vunpack.c.l.b16 %v165
  %v673 = vunpack.c.h.b16 %v165
  %v674 = vunpack.c.l.b16 %v166
  %v675 = vunpack.c.h.b16 %v166
  %v676 = vunpack.c.l.b16 %v167
  %v677 = vunpack.c.h.b16 %v167
  %v678 = vunpack.c.l.b16 %v168
  %v679 = vunpack.c.h.b16 %v168
  %v680 = vunpack.c.l.b16 %v169
  %v681 = vunpack.c.h.b16 %v169
  %v682 = vunpack.c.l.b16 %v170
  %v683 = vunpack.c.h.b16 %v170
  %v684 = vunpack.c.l.b16 %v171
  %v685 = vunpack.c.h.b16 %v171
  %v686 = vunpack.c.l.b16 %v172
  %v687 = vunpack.c.h.b16 %v172
  %v688 = vunpack.c.l.b16 %v173
  %v689 = vunpack.c.h.b16 %v173
  %v690 = vunpack.c.l.b16 %v174
  %v691 = vunpack.c.h.b16 %v174
  %v692 = vunpack.c.l.b16 %v175
  %v693 = vunpack.c.h.b16 %v175
  %v694 = vunpack.c.l.b16 %v176
  %v695 = vunpack.c.h.b16 %v176
  %v696 = vunpack.c.l.b16 %v177
  %v697 = vunpack.c.h.b16 %v177
  %v698 = vunpack.c.l.b16 %v178
  %v699 = vunpack.c.h.b16 %v178
  %v700 = vunpack.c.l.b16 %v179
  %v701 = vunpack.c.h.b16 %v179
  %v702 = vunpack.c.l.b16 %v180
  %v703 = vunpack.c.h.b16 %v180
  %v704 = vunpack.c.l.b16 %v181
  %v705 = vunpack.c.h.b16 %v181
  %v706 = vunpack.c.l.b16 %v182
  %v707 = vunpack.c.h.b16 %v182
  %v708 = vpack.c.b16 %v626, %v624
  %v709 = vpack.c.b16 %v627, %v625
  %v710 = vpack.c.b16 %v630, %v628
  %v711 = vpack.c.b16 %v631, %v629
  %v712 = vpack.c.b16 %v634, %v632
  %v713 = vpack.c.b16 %v635, %v633
  %v714 = vpack.c.b16 %v638, %v636
  %v715 = vpack.c.b16 %v639, %v637
  %v716 = vpack.c.b16 %v642, %v640
  %v717 = vpack.c.b16 %v643, %v641
  %v718 = vpack.c.b16 %v646, %v644
  %v719 = vpack.c.b16 %v647, %v645
  %v720 = vpack.c.b16 %v650, %v648
  %v721 = vpack.c.b16 %v651, %v649
  %v722 = vpack.c.b16 %v654, %v652
  %v723 = vpack.c.b16 %v655, %v653
  %v724 = vpack.c.b16 %v658, %v656
  %v725 = vpack.c.b16 %v659, %v657
  %v726 = vpack.c.b16 %v662, %v660
  %v727 = vpack.c.b16 %v663, %v661
  %v728 = vpack.c.b16 %v666, %v664
  %v729 = vpack.c.b16 %v667, %v665
  %v730 = vpack.c.b16 %v670, %v668
  %v731 = vpack.c.b16 %v671, %v669
  %v732 = vpack.c.b16 %v674, %v672
  %v733 = vpack.c.b16 %v675, %v673
  %v734 = vpack.c.b16 %v678, %v676
  %v735 = vpack.c.b16 %v679, %v677
  %v736 = vpack.c.b16 %v682, %v680
  %v737 = vpack.c.b16 %v683, %v681
  %v738 = vpack.c.b16 %v686, %v684
  %v739 = vpack.c.b16 %v687, %v685
  %v740 = vpack.c.b16 %v690, %v688
  %v741 = vpack.c.b16 %v691, %v689
  %v742 = vpack.c.b16 %v694, %v692
  %v743 = vpack.c.b16 %v695, %v693
  %v744 = vpack.c.b16 %v698, %v696
  %v745 = vpack.c.b16 %v699, %v697
  %v746 = vpack.c.b16 %v702, %v700
  %v747 = vpack.c.b16 %v703, %v701
  %v748 = vpack.c.b16 %v706, %v704
  %v749 = vpack.c.b16 %v707, %v705
  %vm792 = vcmask 654336
  %v794 = vsel %vm792, %v479, 0
  %v797 = vsel %vm792, %v482, 0
  %v800 = vsel %vm792, %v485, 0
  %v803 = vsel %vm792, %v488, 0
  %v806 = vsel %vm792, %v491, 0
  %v809 = vsel %vm792, %v494, 0
  %v812 = vsel %vm792, %v497, 0
  %v815 = vsel %vm792, %v500, 0
  %v818 = vsel %vm792, %v503, 0
  %v821 = vsel %vm792, %v506, 0
  %v824 = vsel %vm792, %v509, 0
  %v827 = vsel %vm792, %v512, 0
  %v830 = vsel %vm792, %v515, 0
  %v833 = vsel %vm792, %v518, 0
  %v836 = vsel %vm792, %v521, 0
  %v839 = vsel %vm792, %v524, 0
  %v842 = vsel %vm792, %v527, 0
  %v845 = vsel %vm792, %v530, 0
  %v848 = vsel %vm792, %v533, 0
  %v851 = vsel %vm792, %v536, 0
  %v854 = vsel %vm792, %v539, 0
  %856 = vmatprep.subr.bf16.mxu0 %v709
  %857 = vmatpush1.bf16.msra.mxu0 %v708
  %858 = vmatprep.subr.bf16.mxu0 %v711
  %859 = vmatpush1.bf16.msra.mxu0 %v710
  %860 = vmatprep.subr.bf16.mxu0 %v713
  %861 = vmatpush1.bf16.msra.mxu0 %v712
  %862 = vmatprep.subr.bf16.mxu0 %v715
  %863 = vmatpush1.bf16.msra.mxu0 %v714
  %864 = vmatprep.subr.bf16.mxu0 %v717
  %865 = vmatpush1.bf16.msra.mxu0 %v716
  %866 = vmatprep.subr.bf16.mxu0 %v719
  %867 = vmatpush1.bf16.msra.mxu0 %v718
  %868 = vmatprep.subr.bf16.mxu0 %v721
  %869 = vmatpush1.bf16.msra.mxu0 %v720
  %870 = vmatprep.subr.bf16.mxu0 %v723
  %871 = vmatpush1.bf16.msra.mxu0 %v722
  %872 = vmatprep.subr.bf16.mxu0 %v725
  %873 = vmatpush1.bf16.msra.mxu0 %v724
  %874 = vmatprep.subr.bf16.mxu0 %v727
  %875 = vmatpush1.bf16.msra.mxu0 %v726
  %876 = vmatprep.subr.bf16.mxu0 %v729
  %877 = vmatpush1.bf16.msra.mxu0 %v728
  %878 = vmatprep.subr.bf16.mxu0 %v731
  %879 = vmatpush1.bf16.msra.mxu0 %v730
  %880 = vmatprep.subr.bf16.mxu0 %v733
  %881 = vmatpush1.bf16.msra.mxu0 %v732
  %882 = vmatprep.subr.bf16.mxu0 %v735
  %883 = vmatpush1.bf16.msra.mxu0 %v734
  %884 = vmatprep.subr.bf16.mxu0 %v737
  %885 = vmatpush1.bf16.msra.mxu0 %v736
  %886 = vmatprep.subr.bf16.mxu0 %v739
  %887 = vmatpush1.bf16.msra.mxu0 %v738
  %888 = vmatprep.mubr.bf16.mxu0 %v478
  %889 = vmatmul.mubr.bf16.gmra.mrb[0].mxu0 %v477
  %v890 = vpop.f32.mrb[0].mxu0
  %v891 = vadd.f32 0.0, %v890
  %v892 = vpop.f32.mrb[0].mxu0
  %v893 = vadd.f32 0.0, %v892
  %v894 = vpop.f32.mrb[0].mxu0
  %v895 = vadd.f32 0.0, %v894
  %v896 = vpop.f32.mrb[0].mxu0
  %v897 = vadd.f32 0.0, %v896
  %898 = vmatprep.mubr.bf16.mxu0 %v481
  %899 = vmatmul.mubr.bf16.gmra.mrb[0].mxu0 %v480
  %v900 = vpop.f32.mrb[0].mxu0
  %v901 = vadd.f32 0.0, %v900
  %v902 = vpop.f32.mrb[0].mxu0
  %v903 = vadd.f32 0.0, %v902
  %v904 = vpop.f32.mrb[0].mxu0
  %v905 = vadd.f32 0.0, %v904
  %v906 = vpop.f32.mrb[0].mxu0
  %v907 = vadd.f32 0.0, %v906
  %908 = vmatprep.mubr.bf16.mxu0 %v484
  %909 = vmatmul.mubr.bf16.gmra.mrb[0].mxu0 %v483
  %v910 = vpop.f32.mrb[0].mxu0
  %v911 = vadd.f32 0.0, %v910
  %v912 = vpop.f32.mrb[0].mxu0
  %v913 = vadd.f32 0.0, %v912
  %v914 = vpop.f32.mrb[0].mxu0
  %v915 = vadd.f32 0.0, %v914
  %v916 = vpop.f32.mrb[0].mxu0
  %v917 = vadd.f32 0.0, %v916
  %918 = vmatprep.mubr.bf16.mxu0 %v487
  %919 = vmatmul.mubr.bf16.gmra.mrb[0].mxu0 %v486
  %v920 = vpop.f32.mrb[0].mxu0
  %v921 = vadd.f32 0.0, %v920
  %v922 = vpop.f32.mrb[0].mxu0
  %v923 = vadd.f32 0.0, %v922
  %v924 = vpop.f32.mrb[0].mxu0
  %v925 = vadd.f32 0.0, %v924
  %v926 = vpop.f32.mrb[0].mxu0
  %v927 = vadd.f32 0.0, %v926
  %928 = vmatprep.mubr.bf16.mxu0 %v490
  %929 = vmatmul.mubr.bf16.gmra.mrb[0].mxu0 %v489
  %v930 = vpop.f32.mrb[0].mxu0
  %v931 = vadd.f32 0.0, %v930
  %v932 = vpop.f32.mrb[0].mxu0
  %v933 = vadd.f32 0.0, %v932
  %v934 = vpop.f32.mrb[0].mxu0
  %v935 = vadd.f32 0.0, %v934
  %v936 = vpop.f32.mrb[0].mxu0
  %v937 = vadd.f32 0.0, %v936
  %938 = vmatprep.mubr.bf16.mxu0 %v493
  %939 = vmatmul.mubr.bf16.gmra.mrb[0].mxu0 %v492
  %v940 = vpop.f32.mrb[0].mxu0
  %v941 = vadd.f32 0.0, %v940
  %v942 = vpop.f32.mrb[0].mxu0
  %v943 = vadd.f32 0.0, %v942
  %v944 = vpop.f32.mrb[0].mxu0
  %v945 = vadd.f32 0.0, %v944
  %v946 = vpop.f32.mrb[0].mxu0
  %v947 = vadd.f32 0.0, %v946
  %948 = vmatprep.mubr.bf16.mxu0 %v496
  %949 = vmatmul.mubr.bf16.gmra.mrb[0].mxu0 %v495
  %v950 = vpop.f32.mrb[0].mxu0
  %v951 = vadd.f32 0.0, %v950
  %v952 = vpop.f32.mrb[0].mxu0
  %v953 = vadd.f32 0.0, %v952
  %v954 = vpop.f32.mrb[0].mxu0
  %v955 = vadd.f32 0.0, %v954
  %v956 = vpop.f32.mrb[0].mxu0
  %v957 = vadd.f32 0.0, %v956
  %958 = vmatprep.mubr.bf16.mxu0 %v499
  %959 = vmatmul.mubr.bf16.gmra.mrb[0].mxu0 %v498
  %v960 = vpop.f32.mrb[0].mxu0
  %v961 = vadd.f32 0.0, %v960
  %v962 = vpop.f32.mrb[0].mxu0
  %v963 = vadd.f32 0.0, %v962
  %v964 = vpop.f32.mrb[0].mxu0
  %v965 = vadd.f32 0.0, %v964
  %v966 = vpop.f32.mrb[0].mxu0
  %v967 = vadd.f32 0.0, %v966
  %968 = vmatprep.mubr.bf16.mxu0 %v502
  %969 = vmatmul.mubr.bf16.gmra.mrb[0].mxu0 %v501
  %v970 = vpop.f32.mrb[0].mxu0
  %v971 = vadd.f32 0.0, %v970
  %v972 = vpop.f32.mrb[0].mxu0
  %v973 = vadd.f32 0.0, %v972
  %v974 = vpop.f32.mrb[0].mxu0
  %v975 = vadd.f32 0.0, %v974
  %v976 = vpop.f32.mrb[0].mxu0
  %v977 = vadd.f32 0.0, %v976
  %978 = vmatprep.mubr.bf16.mxu0 %v505
  %979 = vmatmul.mubr.bf16.gmra.mrb[0].mxu0 %v504
  %v980 = vpop.f32.mrb[0].mxu0
  %v981 = vadd.f32 0.0, %v980
  %v982 = vpop.f32.mrb[0].mxu0
  %v983 = vadd.f32 0.0, %v982
  %v984 = vpop.f32.mrb[0].mxu0
  %v985 = vadd.f32 0.0, %v984
  %v986 = vpop.f32.mrb[0].mxu0
  %v987 = vadd.f32 0.0, %v986
  %988 = vmatprep.mubr.bf16.mxu0 %v508
  %989 = vmatmul.mubr.bf16.gmra.mrb[0].mxu0 %v507
  %v990 = vpop.f32.mrb[0].mxu0
  %v991 = vadd.f32 0.0, %v990
  %v992 = vpop.f32.mrb[0].mxu0
  %v993 = vadd.f32 0.0, %v992
  %v994 = vpop.f32.mrb[0].mxu0
  %v995 = vadd.f32 0.0, %v994
  %v996 = vpop.f32.mrb[0].mxu0
  %v997 = vadd.f32 0.0, %v996
  %998 = vmatprep.mubr.bf16.mxu0 %v511
  %999 = vmatmul.mubr.bf16.gmra.mrb[0].mxu0 %v510
  %v1000 = vpop.f32.mrb[0].mxu0
  %v1001 = vadd.f32 0.0, %v1000
  %v1002 = vpop.f32.mrb[0].mxu0
  %v1003 = vadd.f32 0.0, %v1002
  %v1004 = vpop.f32.mrb[0].mxu0
  %v1005 = vadd.f32 0.0, %v1004
  %v1006 = vpop.f32.mrb[0].mxu0
  %v1007 = vadd.f32 0.0, %v1006
  %1008 = vmatprep.mubr.bf16.mxu0 %v514
  %1009 = vmatmul.mubr.bf16.gmra.mrb[0].mxu0 %v513
  %v1010 = vpop.f32.mrb[0].mxu0
  %v1011 = vadd.f32 0.0, %v1010
  %v1012 = vpop.f32.mrb[0].mxu0
  %v1013 = vadd.f32 0.0, %v1012
  %v1014 = vpop.f32.mrb[0].mxu0
  %v1015 = vadd.f32 0.0, %v1014
  %v1016 = vpop.f32.mrb[0].mxu0
  %v1017 = vadd.f32 0.0, %v1016
  %1018 = vmatprep.mubr.bf16.mxu0 %v517
  %1019 = vmatmul.mubr.bf16.gmra.mrb[0].mxu0 %v516
  %v1020 = vpop.f32.mrb[0].mxu0
  %v1021 = vadd.f32 0.0, %v1020
  %v1022 = vpop.f32.mrb[0].mxu0
  %v1023 = vadd.f32 0.0, %v1022
  %v1024 = vpop.f32.mrb[0].mxu0
  %v1025 = vadd.f32 0.0, %v1024
  %v1026 = vpop.f32.mrb[0].mxu0
  %v1027 = vadd.f32 0.0, %v1026
  %1028 = vmatprep.mubr.bf16.mxu0 %v520
  %1029 = vmatmul.mubr.bf16.gmra.mrb[0].mxu0 %v519
  %v1030 = vpop.f32.mrb[0].mxu0
  %v1031 = vadd.f32 0.0, %v1030
  %v1032 = vpop.f32.mrb[0].mxu0
  %v1033 = vadd.f32 0.0, %v1032
  %v1034 = vpop.f32.mrb[0].mxu0
  %v1035 = vadd.f32 0.0, %v1034
  %v1036 = vpop.f32.mrb[0].mxu0
  %v1037 = vadd.f32 0.0, %v1036
  %1038 = vmatprep.mubr.bf16.mxu0 %v523
  %1039 = vmatmul.mubr.bf16.gmra.mrb[0].mxu0 %v522
  %v1040 = vpop.f32.mrb[0].mxu0
  %v1041 = vadd.f32 0.0, %v1040
  %v1042 = vpop.f32.mrb[0].mxu0
  %v1043 = vadd.f32 0.0, %v1042
  %v1044 = vpop.f32.mrb[0].mxu0
  %v1045 = vadd.f32 0.0, %v1044
  %v1046 = vpop.f32.mrb[0].mxu0
  %v1047 = vadd.f32 0.0, %v1046
  %1048 = vmatprep.mubr.bf16.mxu0 %v526
  %1049 = vmatmul.mubr.bf16.gmra.mrb[0].mxu0 %v525
  %v1050 = vpop.f32.mrb[0].mxu0
  %v1051 = vadd.f32 0.0, %v1050
  %v1052 = vpop.f32.mrb[0].mxu0
  %v1053 = vadd.f32 0.0, %v1052
  %v1054 = vpop.f32.mrb[0].mxu0
  %v1055 = vadd.f32 0.0, %v1054
  %v1056 = vpop.f32.mrb[0].mxu0
  %v1057 = vadd.f32 0.0, %v1056
  %1058 = vmatprep.mubr.bf16.mxu0 %v529
  %1059 = vmatmul.mubr.bf16.gmra.mrb[0].mxu0 %v528
  %v1060 = vpop.f32.mrb[0].mxu0
  %v1061 = vadd.f32 0.0, %v1060
  %v1062 = vpop.f32.mrb[0].mxu0
  %v1063 = vadd.f32 0.0, %v1062
  %v1064 = vpop.f32.mrb[0].mxu0
  %v1065 = vadd.f32 0.0, %v1064
  %v1066 = vpop.f32.mrb[0].mxu0
  %v1067 = vadd.f32 0.0, %v1066
  %1068 = vmatprep.mubr.bf16.mxu0 %v532
  %1069 = vmatmul.mubr.bf16.gmra.mrb[0].mxu0 %v531
  %v1070 = vpop.f32.mrb[0].mxu0
  %v1071 = vadd.f32 0.0, %v1070
  %v1072 = vpop.f32.mrb[0].mxu0
  %v1073 = vadd.f32 0.0, %v1072
  %v1074 = vpop.f32.mrb[0].mxu0
  %v1075 = vadd.f32 0.0, %v1074
  %v1076 = vpop.f32.mrb[0].mxu0
  %v1077 = vadd.f32 0.0, %v1076
  %1078 = vmatprep.mubr.bf16.mxu0 %v535
  %1079 = vmatmul.mubr.bf16.gmra.mrb[0].mxu0 %v534
  %v1080 = vpop.f32.mrb[0].mxu0
  %v1081 = vadd.f32 0.0, %v1080
  %v1082 = vpop.f32.mrb[0].mxu0
  %v1083 = vadd.f32 0.0, %v1082
  %v1084 = vpop.f32.mrb[0].mxu0
  %v1085 = vadd.f32 0.0, %v1084
  %v1086 = vpop.f32.mrb[0].mxu0
  %v1087 = vadd.f32 0.0, %v1086
  %1088 = vmatprep.mubr.bf16.mxu0 %v538
  %1089 = vmatmul.mubr.bf16.gmra.mrb[0].mxu0 %v537
  %v1090 = vpop.f32.mrb[0].mxu0
  %v1091 = vadd.f32 0.0, %v1090
  %v1092 = vpop.f32.mrb[0].mxu0
  %v1093 = vadd.f32 0.0, %v1092
  %v1094 = vpop.f32.mrb[0].mxu0
  %v1095 = vadd.f32 0.0, %v1094
  %v1096 = vpop.f32.mrb[0].mxu0
  %v1097 = vadd.f32 0.0, %v1096
  %1098 = vdwg.mxu0
  %1099 = vmatprep.subr.bf16.mxu0 %v741
  %1100 = vmatpush1.bf16.msra.mxu0 %v740
  %1101 = vmatprep.subr.bf16.mxu0 %v743
  %1102 = vmatpush1.bf16.msra.mxu0 %v742
  %1103 = vmatprep.subr.bf16.mxu0 %v745
  %1104 = vmatpush1.bf16.msra.mxu0 %v744
  %1105 = vmatprep.subr.bf16.mxu0 %v747
  %1106 = vmatpush1.bf16.msra.mxu0 %v746
  %1107 = vmatprep.subr.bf16.mxu0 %v749
  %1108 = vmatpush1.bf16.msra.mxu0 %v748
  %1109 = vmatprep.subr.bf16.mxu0 0
  %1110 = vmatpush1.bf16.msra.mxu0 0
  %1111 = vmatprep.subr.bf16.mxu0 0
  %1112 = vmatpush1.bf16.msra.mxu0 0
  %1113 = vmatprep.subr.bf16.mxu0 0
  %1114 = vmatpush1.bf16.msra.mxu0 0
  %1115 = vmatprep.subr.bf16.mxu0 0
  %1116 = vmatpush1.bf16.msra.mxu0 0
  %1117 = vmatprep.subr.bf16.mxu0 0
  %1118 = vmatpush1.bf16.msra.mxu0 0
  %1119 = vmatprep.subr.bf16.mxu0 0
  %1120 = vmatpush1.bf16.msra.mxu0 0
  %1121 = vmatprep.subr.bf16.mxu0 0
  %1122 = vmatpush1.bf16.msra.mxu0 0
  %1123 = vmatprep.subr.bf16.mxu0 0
  %1124 = vmatpush1.bf16.msra.mxu0 0
  %1125 = vmatprep.subr.bf16.mxu0 0
  %1126 = vmatpush1.bf16.msra.mxu0 0
  %1127 = vmatprep.subr.bf16.mxu0 0
  %1128 = vmatpush1.bf16.msra.mxu0 0
  %1129 = vmatprep.subr.bf16.mxu0 0
  %1130 = vmatpush1.bf16.msra.mxu0 0
  %1131 = vmatprep.mubr.bf16.mxu0 0
  %1132 = vmatmul.mubr.bf16.gmra.mrb[0].mxu0 %v794
  %v1133 = vpop.f32.mrb[0].mxu0
  %v1134 = vadd.f32 %v891, %v1133
  %v1135 = vpop.f32.mrb[0].mxu0
  %v1136 = vadd.f32 %v893, %v1135
  %v1137 = vpop.f32.mrb[0].mxu0
  %v1138 = vadd.f32 %v895, %v1137
  %v1139 = vpop.f32.mrb[0].mxu0
  %v1140 = vadd.f32 %v897, %v1139
  %1141 = vmatprep.mubr.bf16.mxu0 0
  %1142 = vmatmul.mubr.bf16.gmra.mrb[0].mxu0 %v797
  %v1143 = vpop.f32.mrb[0].mxu0
  %v1144 = vadd.f32 %v901, %v1143
  %v1145 = vpop.f32.mrb[0].mxu0
  %v1146 = vadd.f32 %v903, %v1145
  %v1147 = vpop.f32.mrb[0].mxu0
  %v1148 = vadd.f32 %v905, %v1147
  %v1149 = vpop.f32.mrb[0].mxu0
  %v1150 = vadd.f32 %v907, %v1149
  %1151 = vmatprep.mubr.bf16.mxu0 0
  %1152 = vmatmul.mubr.bf16.gmra.mrb[0].mxu0 %v800
  %v1153 = vpop.f32.mrb[0].mxu0
  %v1154 = vadd.f32 %v911, %v1153
  %v1155 = vpop.f32.mrb[0].mxu0
  %v1156 = vadd.f32 %v913, %v1155
  %v1157 = vpop.f32.mrb[0].mxu0
  %v1158 = vadd.f32 %v915, %v1157
  %v1159 = vpop.f32.mrb[0].mxu0
  %v1160 = vadd.f32 %v917, %v1159
  %1161 = vmatprep.mubr.bf16.mxu0 0
  %1162 = vmatmul.mubr.bf16.gmra.mrb[0].mxu0 %v803
  %v1163 = vpop.f32.mrb[0].mxu0
  %v1164 = vadd.f32 %v921, %v1163
  %v1165 = vpop.f32.mrb[0].mxu0
  %v1166 = vadd.f32 %v923, %v1165
  %v1167 = vpop.f32.mrb[0].mxu0
  %v1168 = vadd.f32 %v925, %v1167
  %v1169 = vpop.f32.mrb[0].mxu0
  %v1170 = vadd.f32 %v927, %v1169
  %1171 = vmatprep.mubr.bf16.mxu0 0
  %1172 = vmatmul.mubr.bf16.gmra.mrb[0].mxu0 %v806
  %v1173 = vpop.f32.mrb[0].mxu0
  %v1174 = vadd.f32 %v931, %v1173
  %v1175 = vpop.f32.mrb[0].mxu0
  %v1176 = vadd.f32 %v933, %v1175
  %v1177 = vpop.f32.mrb[0].mxu0
  %v1178 = vadd.f32 %v935, %v1177
  %v1179 = vpop.f32.mrb[0].mxu0
  %v1180 = vadd.f32 %v937, %v1179
  %1181 = vmatprep.mubr.bf16.mxu0 0
  %1182 = vmatmul.mubr.bf16.gmra.mrb[0].mxu0 %v809
  %v1183 = vpop.f32.mrb[0].mxu0
  %v1184 = vadd.f32 %v941, %v1183
  %v1185 = vpop.f32.mrb[0].mxu0
  %v1186 = vadd.f32 %v943, %v1185
  %v1187 = vpop.f32.mrb[0].mxu0
  %v1188 = vadd.f32 %v945, %v1187
  %v1189 = vpop.f32.mrb[0].mxu0
  %v1190 = vadd.f32 %v947, %v1189
  %1191 = vmatprep.mubr.bf16.mxu0 0
  %1192 = vmatmul.mubr.bf16.gmra.mrb[0].mxu0 %v812
  %v1193 = vpop.f32.mrb[0].mxu0
  %v1194 = vadd.f32 %v951, %v1193
  %v1195 = vpop.f32.mrb[0].mxu0
  %v1196 = vadd.f32 %v953, %v1195
  %v1197 = vpop.f32.mrb[0].mxu0
  %v1198 = vadd.f32 %v955, %v1197
  %v1199 = vpop.f32.mrb[0].mxu0
  %v1200 = vadd.f32 %v957, %v1199
  %1201 = vmatprep.mubr.bf16.mxu0 0
  %1202 = vmatmul.mubr.bf16.gmra.mrb[0].mxu0 %v815
  %v1203 = vpop.f32.mrb[0].mxu0
  %v1204 = vadd.f32 %v961, %v1203
  %v1205 = vpop.f32.mrb[0].mxu0
  %v1206 = vadd.f32 %v963, %v1205
  %v1207 = vpop.f32.mrb[0].mxu0
  %v1208 = vadd.f32 %v965, %v1207
  %v1209 = vpop.f32.mrb[0].mxu0
  %v1210 = vadd.f32 %v967, %v1209
  %1211 = vmatprep.mubr.bf16.mxu0 0
  %1212 = vmatmul.mubr.bf16.gmra.mrb[0].mxu0 %v818
  %v1213 = vpop.f32.mrb[0].mxu0
  %v1214 = vadd.f32 %v971, %v1213
  %v1215 = vpop.f32.mrb[0].mxu0
  %v1216 = vadd.f32 %v973, %v1215
  %v1217 = vpop.f32.mrb[0].mxu0
  %v1218 = vadd.f32 %v975, %v1217
  %v1219 = vpop.f32.mrb[0].mxu0
  %v1220 = vadd.f32 %v977, %v1219
  %1221 = vmatprep.mubr.bf16.mxu0 0
  %1222 = vmatmul.mubr.bf16.gmra.mrb[0].mxu0 %v821
  %v1223 = vpop.f32.mrb[0].mxu0
  %v1224 = vadd.f32 %v981, %v1223
  %v1225 = vpop.f32.mrb[0].mxu0
  %v1226 = vadd.f32 %v983, %v1225
  %v1227 = vpop.f32.mrb[0].mxu0
  %v1228 = vadd.f32 %v985, %v1227
  %v1229 = vpop.f32.mrb[0].mxu0
  %v1230 = vadd.f32 %v987, %v1229
  %1231 = vmatprep.mubr.bf16.mxu0 0
  %1232 = vmatmul.mubr.bf16.gmra.mrb[0].mxu0 %v824
  %v1233 = vpop.f32.mrb[0].mxu0
  %v1234 = vadd.f32 %v991, %v1233
  %v1235 = vpop.f32.mrb[0].mxu0
  %v1236 = vadd.f32 %v993, %v1235
  %v1237 = vpop.f32.mrb[0].mxu0
  %v1238 = vadd.f32 %v995, %v1237
  %v1239 = vpop.f32.mrb[0].mxu0
  %v1240 = vadd.f32 %v997, %v1239
  %1241 = vmatprep.mubr.bf16.mxu0 0
  %1242 = vmatmul.mubr.bf16.gmra.mrb[0].mxu0 %v827
  %v1243 = vpop.f32.mrb[0].mxu0
  %v1244 = vadd.f32 %v1001, %v1243
  %v1245 = vpop.f32.mrb[0].mxu0
  %v1246 = vadd.f32 %v1003, %v1245
  %v1247 = vpop.f32.mrb[0].mxu0
  %v1248 = vadd.f32 %v1005, %v1247
  %v1249 = vpop.f32.mrb[0].mxu0
  %v1250 = vadd.f32 %v1007, %v1249
  %1251 = vmatprep.mubr.bf16.mxu0 0
  %1252 = vmatmul.mubr.bf16.gmra.mrb[0].mxu0 %v830
  %v1253 = vpop.f32.mrb[0].mxu0
  %v1254 = vadd.f32 %v1011, %v1253
  %v1255 = vpop.f32.mrb[0].mxu0
  %v1256 = vadd.f32 %v1013, %v1255
  %v1257 = vpop.f32.mrb[0].mxu0
  %v1258 = vadd.f32 %v1015, %v1257
  %v1259 = vpop.f32.mrb[0].mxu0
  %v1260 = vadd.f32 %v1017, %v1259
  %1261 = vmatprep.mubr.bf16.mxu0 0
  %1262 = vmatmul.mubr.bf16.gmra.mrb[0].mxu0 %v833
  %v1263 = vpop.f32.mrb[0].mxu0
  %v1264 = vadd.f32 %v1021, %v1263
  %v1265 = vpop.f32.mrb[0].mxu0
  %v1266 = vadd.f32 %v1023, %v1265
  %v1267 = vpop.f32.mrb[0].mxu0
  %v1268 = vadd.f32 %v1025, %v1267
  %v1269 = vpop.f32.mrb[0].mxu0
  %v1270 = vadd.f32 %v1027, %v1269
  %1271 = vmatprep.mubr.bf16.mxu0 0
  %1272 = vmatmul.mubr.bf16.gmra.mrb[0].mxu0 %v836
  %v1273 = vpop.f32.mrb[0].mxu0
  %v1274 = vadd.f32 %v1031, %v1273
  %v1275 = vpop.f32.mrb[0].mxu0
  %v1276 = vadd.f32 %v1033, %v1275
  %v1277 = vpop.f32.mrb[0].mxu0
  %v1278 = vadd.f32 %v1035, %v1277
  %v1279 = vpop.f32.mrb[0].mxu0
  %v1280 = vadd.f32 %v1037, %v1279
  %1281 = vmatprep.mubr.bf16.mxu0 0
  %1282 = vmatmul.mubr.bf16.gmra.mrb[0].mxu0 %v839
  %v1283 = vpop.f32.mrb[0].mxu0
  %v1284 = vadd.f32 %v1041, %v1283
  %v1285 = vpop.f32.mrb[0].mxu0
  %v1286 = vadd.f32 %v1043, %v1285
  %v1287 = vpop.f32.mrb[0].mxu0
  %v1288 = vadd.f32 %v1045, %v1287
  %v1289 = vpop.f32.mrb[0].mxu0
  %v1290 = vadd.f32 %v1047, %v1289
  %1291 = vmatprep.mubr.bf16.mxu0 0
  %1292 = vmatmul.mubr.bf16.gmra.mrb[0].mxu0 %v842
  %v1293 = vpop.f32.mrb[0].mxu0
  %v1294 = vadd.f32 %v1051, %v1293
  %v1295 = vpop.f32.mrb[0].mxu0
  %v1296 = vadd.f32 %v1053, %v1295
  %v1297 = vpop.f32.mrb[0].mxu0
  %v1298 = vadd.f32 %v1055, %v1297
  %v1299 = vpop.f32.mrb[0].mxu0
  %v1300 = vadd.f32 %v1057, %v1299
  %1301 = vmatprep.mubr.bf16.mxu0 0
  %1302 = vmatmul.mubr.bf16.gmra.mrb[0].mxu0 %v845
  %v1303 = vpop.f32.mrb[0].mxu0
  %v1304 = vadd.f32 %v1061, %v1303
  %v1305 = vpop.f32.mrb[0].mxu0
  %v1306 = vadd.f32 %v1063, %v1305
  %v1307 = vpop.f32.mrb[0].mxu0
  %v1308 = vadd.f32 %v1065, %v1307
  %v1309 = vpop.f32.mrb[0].mxu0
  %v1310 = vadd.f32 %v1067, %v1309
  %1311 = vmatprep.mubr.bf16.mxu0 0
  %1312 = vmatmul.mubr.bf16.gmra.mrb[0].mxu0 %v848
  %v1313 = vpop.f32.mrb[0].mxu0
  %v1314 = vadd.f32 %v1071, %v1313
  %v1315 = vpop.f32.mrb[0].mxu0
  %v1316 = vadd.f32 %v1073, %v1315
  %v1317 = vpop.f32.mrb[0].mxu0
  %v1318 = vadd.f32 %v1075, %v1317
  %v1319 = vpop.f32.mrb[0].mxu0
  %v1320 = vadd.f32 %v1077, %v1319
  %1321 = vmatprep.mubr.bf16.mxu0 0
  %1322 = vmatmul.mubr.bf16.gmra.mrb[0].mxu0 %v851
  %v1323 = vpop.f32.mrb[0].mxu0
  %v1324 = vadd.f32 %v1081, %v1323
  %v1325 = vpop.f32.mrb[0].mxu0
  %v1326 = vadd.f32 %v1083, %v1325
  %v1327 = vpop.f32.mrb[0].mxu0
  %v1328 = vadd.f32 %v1085, %v1327
  %v1329 = vpop.f32.mrb[0].mxu0
  %v1330 = vadd.f32 %v1087, %v1329
  %1331 = vmatprep.mubr.bf16.mxu0 0
  %1332 = vmatmul.mubr.bf16.gmra.mrb[0].mxu0 %v854
  %v1333 = vpop.f32.mrb[0].mxu0
  %v1334 = vadd.f32 %v1091, %v1333
  %v1335 = vpop.f32.mrb[0].mxu0
  %v1336 = vadd.f32 %v1093, %v1335
  %v1337 = vpop.f32.mrb[0].mxu0
  %v1338 = vadd.f32 %v1095, %v1337
  %v1339 = vpop.f32.mrb[0].mxu0
  %v1340 = vadd.f32 %v1097, %v1339
  %1341 = vdwg.mxu0
  %1342 = vst [vmem:[%s3] sm:$0xff] %v1134
  %vm1343 = vcmask 556032
  %1344 = vst.msk [vmem:[%s3 + $0x8] sm:$0xff] %vm1343, %v1136
  %1345 = vst [vmem:[%s3 + $0x10] sm:$0xff] %v1138
  %1346 = vst.msk [vmem:[%s3 + $0x18] sm:$0xff] %vm1343, %v1140
  %1347 = vst [vmem:[%s3 + $0x20] sm:$0xff] %v1144
  %1348 = vst.msk [vmem:[%s3 + $0x28] sm:$0xff] %vm1343, %v1146
  %1349 = vst [vmem:[%s3 + $0x30] sm:$0xff] %v1148
  %1350 = vst.msk [vmem:[%s3 + $0x38] sm:$0xff] %vm1343, %v1150
  %1351 = vst [vmem:[%s3 + $0x40] sm:$0xff] %v1154
  %1352 = vst.msk [vmem:[%s3 + $0x48] sm:$0xff] %vm1343, %v1156
  %1353 = vst [vmem:[%s3 + $0x50] sm:$0xff] %v1158
  %1354 = vst.msk [vmem:[%s3 + $0x58] sm:$0xff] %vm1343, %v1160
  %1355 = vst [vmem:[%s3 + $0x60] sm:$0xff] %v1164
  %1356 = vst.msk [vmem:[%s3 + $0x68] sm:$0xff] %vm1343, %v1166
  %1357 = vst [vmem:[%s3 + $0x70] sm:$0xff] %v1168
  %1358 = vst.msk [vmem:[%s3 + $0x78] sm:$0xff] %vm1343, %v1170
  %1359 = vst [vmem:[%s3 + $0x80] sm:$0xff] %v1174
  %1360 = vst.msk [vmem:[%s3 + $0x88] sm:$0xff] %vm1343, %v1176
  %1361 = vst [vmem:[%s3 + $0x90] sm:$0xff] %v1178
  %1362 = vst.msk [vmem:[%s3 + $0x98] sm:$0xff] %vm1343, %v1180
  %1363 = vst [vmem:[%s3 + $0xa0] sm:$0xff] %v1184
  %1364 = vst.msk [vmem:[%s3 + $0xa8] sm:$0xff] %vm1343, %v1186
  %1365 = vst [vmem:[%s3 + $0xb0] sm:$0xff] %v1188
  %1366 = vst.msk [vmem:[%s3 + $0xb8] sm:$0xff] %vm1343, %v1190
  %1367 = vst [vmem:[%s3 + $0xc0] sm:$0xff] %v1194
  %1368 = vst.msk [vmem:[%s3 + $0xc8] sm:$0xff] %vm1343, %v1196
  %1369 = vst [vmem:[%s3 + $0xd0] sm:$0xff] %v1198
  %1370 = vst.msk [vmem:[%s3 + $0xd8] sm:$0xff] %vm1343, %v1200
  %1371 = vst [vmem:[%s3 + $0xe0] sm:$0xff] %v1204
  %1372 = vst.msk [vmem:[%s3 + $0xe8] sm:$0xff] %vm1343, %v1206
  %1373 = vst [vmem:[%s3 + $0xf0] sm:$0xff] %v1208
  %1374 = vst.msk [vmem:[%s3 + $0xf8] sm:$0xff] %vm1343, %v1210
  %1375 = vst [vmem:[%s3 + $0x100] sm:$0xff] %v1214
  %1376 = vst.msk [vmem:[%s3 + $0x108] sm:$0xff] %vm1343, %v1216
  %1377 = vst [vmem:[%s3 + $0x110] sm:$0xff] %v1218
  %1378 = vst.msk [vmem:[%s3 + $0x118] sm:$0xff] %vm1343, %v1220
  %1379 = vst [vmem:[%s3 + $0x120] sm:$0xff] %v1224
  %1380 = vst.msk [vmem:[%s3 + $0x128] sm:$0xff] %vm1343, %v1226
  %1381 = vst [vmem:[%s3 + $0x130] sm:$0xff] %v1228
  %1382 = vst.msk [vmem:[%s3 + $0x138] sm:$0xff] %vm1343, %v1230
  %1383 = vst [vmem:[%s3 + $0x140] sm:$0xff] %v1234
  %1384 = vst.msk [vmem:[%s3 + $0x148] sm:$0xff] %vm1343, %v1236
  %1385 = vst [vmem:[%s3 + $0x150] sm:$0xff] %v1238
  %1386 = vst.msk [vmem:[%s3 + $0x158] sm:$0xff] %vm1343, %v1240
  %1387 = vst [vmem:[%s3 + $0x160] sm:$0xff] %v1244
  %1388 = vst.msk [vmem:[%s3 + $0x168] sm:$0xff] %vm1343, %v1246
  %1389 = vst [vmem:[%s3 + $0x170] sm:$0xff] %v1248
  %1390 = vst.msk [vmem:[%s3 + $0x178] sm:$0xff] %vm1343, %v1250
  %1391 = vst [vmem:[%s3 + $0x180] sm:$0xff] %v1254
  %1392 = vst.msk [vmem:[%s3 + $0x188] sm:$0xff] %vm1343, %v1256
  %1393 = vst [vmem:[%s3 + $0x190] sm:$0xff] %v1258
  %1394 = vst.msk [vmem:[%s3 + $0x198] sm:$0xff] %vm1343, %v1260
  %1395 = vst [vmem:[%s3 + $0x1a0] sm:$0xff] %v1264
  %1396 = vst.msk [vmem:[%s3 + $0x1a8] sm:$0xff] %vm1343, %v1266
  %1397 = vst [vmem:[%s3 + $0x1b0] sm:$0xff] %v1268
  %1398 = vst.msk [vmem:[%s3 + $0x1b8] sm:$0xff] %vm1343, %v1270
  %1399 = vst [vmem:[%s3 + $0x1c0] sm:$0xff] %v1274
  %1400 = vst.msk [vmem:[%s3 + $0x1c8] sm:$0xff] %vm1343, %v1276
  %1401 = vst [vmem:[%s3 + $0x1d0] sm:$0xff] %v1278
  %1402 = vst.msk [vmem:[%s3 + $0x1d8] sm:$0xff] %vm1343, %v1280
  %1403 = vst [vmem:[%s3 + $0x1e0] sm:$0xff] %v1284
  %1404 = vst.msk [vmem:[%s3 + $0x1e8] sm:$0xff] %vm1343, %v1286
  %1405 = vst [vmem:[%s3 + $0x1f0] sm:$0xff] %v1288
  %1406 = vst.msk [vmem:[%s3 + $0x1f8] sm:$0xff] %vm1343, %v1290
  %1407 = vst [vmem:[%s3 + $0x200] sm:$0xff] %v1294
  %1408 = vst.msk [vmem:[%s3 + $0x208] sm:$0xff] %vm1343, %v1296
  %1409 = vst [vmem:[%s3 + $0x210] sm:$0xff] %v1298
  %1410 = vst.msk [vmem:[%s3 + $0x218] sm:$0xff] %vm1343, %v1300
  %1411 = vst [vmem:[%s3 + $0x220] sm:$0xff] %v1304
  %1412 = vst.msk [vmem:[%s3 + $0x228] sm:$0xff] %vm1343, %v1306
  %1413 = vst [vmem:[%s3 + $0x230] sm:$0xff] %v1308
  %1414 = vst.msk [vmem:[%s3 + $0x238] sm:$0xff] %vm1343, %v1310
  %1415 = vst [vmem:[%s3 + $0x240] sm:$0xff] %v1314
  %1416 = vst.msk [vmem:[%s3 + $0x248] sm:$0xff] %vm1343, %v1316
  %1417 = vst [vmem:[%s3 + $0x250] sm:$0xff] %v1318
  %1418 = vst.msk [vmem:[%s3 + $0x258] sm:$0xff] %vm1343, %v1320
  %1419 = vst [vmem:[%s3 + $0x260] sm:$0xff] %v1324
  %1420 = vst.msk [vmem:[%s3 + $0x268] sm:$0xff] %vm1343, %v1326
  %1421 = vst [vmem:[%s3 + $0x270] sm:$0xff] %v1328
  %1422 = vst.msk [vmem:[%s3 + $0x278] sm:$0xff] %vm1343, %v1330
  %1423 = vst [vmem:[%s3 + $0x280] sm:$0xff] %v1334
  %1424 = vst.msk [vmem:[%s3 + $0x288] sm:$0xff] %vm1343, %v1336
  %1425 = vst [vmem:[%s3 + $0x290] sm:$0xff] %v1338
  %1426 = vst.msk [vmem:[%s3 + $0x298] sm:$0xff] %vm1343, %v1340
  // Predicated region
  $region14: #{tpu_custom_call.1} parent=0 // pred_check
    _
  $region15: #{tpu_custom_call.1} parent=0 // pred_check_branch
    %1428 = sbr.rel (0) target = $region17
  $region16: #{tpu_custom_call.1} parent=0 // pred_region
    _
  $region17: #{tpu_custom_call.1} parent=0 // pred_fallthru
    _
  // Predicated region
  $region18: #{tpu_custom_call.1} parent=0 // pred_check
    _
  $region19: #{tpu_custom_call.1} parent=0 // pred_check_branch
    %1430 = sbr.rel (0) target = $region21
  $region20: #{tpu_custom_call.1} parent=0 // pred_region
    _
  $region21: #{tpu_custom_call.1} parent=0 // pred_fallthru
    _

</llo_original>
